<compile_context>
chip_gen: v5e
topology: v5e:2x2
jax: 0.10.0
libtpu: 0.0.40
codegen_flags: <defaults>
</compile_context>

<pallas_src>
import jax
import jax.numpy as jnp
from jax.experimental import pallas as pl
from jax.experimental.pallas import tpu as pltpu


def _round_up(a, b):
    return (a + b - 1) // b * b


def _make_content_loss_kernel(rows, hw, tr, tl):
    # Static (trace-time) decisions: only emit masking code for ragged shapes.
    need_row_mask = rows % tr != 0
    need_lane_mask = hw % tl != 0

    def kernel(x_ref, t_ref, out_ref, acc_ref):
        li = pl.program_id(1)

        @pl.when(li == 0)
        def _():
            acc_ref[...] = jnp.zeros_like(acc_ref)

        # Weight is folded into the final scale outside the hot loop; here we
        # only accumulate raw squared differences (pure VPU, hides under DMA).
        diff = x_ref[...].astype(jnp.float32) - t_ref[...].astype(jnp.float32)
        sq = diff * diff

        if need_row_mask or need_lane_mask:
            mask = None
            if need_row_mask:
                ri = pl.program_id(0)
                row_ids = (jax.lax.broadcasted_iota(jnp.int32, (tr, tl), 0)
                           + ri * tr)
                mask = row_ids < rows
            if need_lane_mask:
                col_ids = (jax.lax.broadcasted_iota(jnp.int32, (tr, tl), 1)
                           + li * tl)
                lane_ok = col_ids < hw
                mask = lane_ok if mask is None else jnp.logical_and(mask, lane_ok)
            # Out-of-bounds block contents are undefined; select (not multiply)
            # so any garbage NaN/Inf in the dead region cannot propagate.
            sq = jnp.where(mask, sq, 0.0)

        acc_ref[...] += sq

        @pl.when(li == pl.num_programs(1) - 1)
        def _():
            # One cross-lane/sublane reduce per row tile; broadcast the scalar
            # partial sum across the lane-dense (1, 8, 128) output block.
            total = jnp.sum(acc_ref[...])
            out_ref[...] = jnp.full(out_ref.shape, total, dtype=jnp.float32)

    return kernel


def content_loss_forward(x, target, weight):
    """Returns (output, loss) exactly like ContentLoss.forward + self.loss."""
    N, C, H, W = x.shape
    rows, hw = N * C, H * W

    x2 = x.reshape(rows, hw)          # contiguous reshape: no HBM copy
    t2 = target.reshape(rows, hw)     # keep native dtype (no wrapper upcast)

    # Lane tile: multiple of 128, capped at 1024.  Row tile: multiple of 8,
    # sized so one f32 block is ~2 MiB (near the measured HBM-roofline knee).
    tl = min(1024, _round_up(hw, 128))
    tr = min(_round_up(rows, 8),
             max(8, ((2 * 1024 * 1024 // 4) // tl) // 8 * 8))

    grid = (pl.cdiv(rows, tr), pl.cdiv(hw, tl))
    kernel = _make_content_loss_kernel(rows, hw, tr, tl)

    partials = pl.pallas_call(
        kernel,
        out_shape=jax.ShapeDtypeStruct((grid[0], 8, 128), jnp.float32),
        grid=grid,
        in_specs=[
            pl.BlockSpec((tr, tl), lambda r, l: (r, l)),
            pl.BlockSpec((tr, tl), lambda r, l: (r, l)),
        ],
        out_specs=pl.BlockSpec((1, 8, 128), lambda r, l: (r, 0, 0)),
        scratch_shapes=[pltpu.VMEM((tr, tl), jnp.float32)],
        compiler_params=pltpu.CompilerParams(
            dimension_semantics=("parallel", "arbitrary"),
            vmem_limit_bytes=32 * 1024 * 1024,
        ),
    )(x2, t2)

    # Each row tile's partial sum is broadcast across its (8, 128) block; take
    # one element per tile, sum, and fold weight^2 and the mean denominator.
    sq_sum = jnp.sum(partials[:, 0, 0])
    loss = sq_sum * (weight * weight) / float(x.size)

    # TODO(synk): backward() / autograd graph retention is training machinery
    # with no forward-pass Pallas equivalent; this implements forward only.
    output = x  # ContentLoss.forward returns its input unchanged
    return output, loss


if __name__ == "__main__":
    key = jax.random.PRNGKey(0)
    k1, k2, k3, k4, k5, k6 = jax.random.split(key, 6)
    weight = 0.75  # deterministic hyperparameter (ContentLoss __init__ arg)

    # Case 1: aligned shapes (rows % 8 == 0, hw % 128 == 0), f32.
    x = jax.random.normal(k1, (2, 4, 16, 16), dtype=jnp.float32)
    target = jax.random.normal(k2, (2, 4, 16, 16), dtype=jnp.float32)
    output, loss = content_loss_forward(x, target, weight)
    output, loss = jax.block_until_ready((output, loss))
    ref = jnp.mean((x * weight - target * weight) ** 2)
    assert jnp.allclose(loss, ref, rtol=1e-5, atol=1e-6), (loss, ref)
    assert jnp.array_equal(output, x)

    # Case 2: ragged shapes -> exercises in-kernel edge masking (no jnp.pad).
    x_b = jax.random.normal(k3, (1, 3, 10, 12), dtype=jnp.float32)
    t_b = jax.random.normal(k4, (1, 3, 10, 12), dtype=jnp.float32)
    out_b, loss_b = content_loss_forward(x_b, t_b, weight)
    out_b, loss_b = jax.block_until_ready((out_b, loss_b))
    ref_b = jnp.mean((x_b * weight - t_b * weight) ** 2)
    assert jnp.allclose(loss_b, ref_b, rtol=1e-5, atol=1e-6), (loss_b, ref_b)
    assert jnp.array_equal(out_b, x_b)

    # Case 3: bf16 activations (native-dtype HBM traffic, f32 accumulation)
    # with ragged spatial extent (14*14 = 196, not a multiple of 128).
    x_c = jax.random.normal(k5, (2, 4, 14, 14), jnp.float32).astype(jnp.bfloat16)
    t_c = jax.random.normal(k6, (2, 4, 14, 14), jnp.float32).astype(jnp.bfloat16)
    out_c, loss_c = content_loss_forward(x_c, t_c, weight)
    out_c, loss_c = jax.block_until_ready((out_c, loss_c))
    x32, t32 = x_c.astype(jnp.float32), t_c.astype(jnp.float32)
    ref_c = jnp.mean((x32 * weight - t32 * weight) ** 2)
    assert jnp.allclose(loss_c, ref_c, rtol=1e-4, atol=1e-6), (loss_c, ref_c)
    assert jnp.array_equal(out_c, x_c)

    print("KERNEL_OK")
</pallas_src>

<mosaic_0001>
module attributes {stable_mosaic.version = 11 : i64} {
  func.func @kernel(%arg0: i32, %arg1: i32, %arg2: memref<8x256xf32, #tpu.memory_space<vmem>>, %arg3: memref<8x256xf32, #tpu.memory_space<vmem>>, %arg4: memref<1x8x128xf32, #tpu.memory_space<vmem>>, %arg5: memref<8x256xf32, #tpu.memory_space<vmem>>) attributes {dimension_semantics = [#tpu.dimension_semantics<parallel>, #tpu.dimension_semantics<arbitrary>], iteration_bounds = array<i64: 1, 1>, scalar_prefetch = 0 : i64, scratch_operands = 1 : i64, tpu.core_type = #tpu.core_type<tc>, window_params = [{transform_indices = @transform_0, window_bounds = array<i64: 8, 256>}, {transform_indices = @transform_1, window_bounds = array<i64: 8, 256>}, {transform_indices = @transform_2, window_bounds = array<i64: 1, 8, 128>}]} {
    %c0_i32 = arith.constant 0 : i32
    %0 = arith.cmpi eq, %arg1, %c0_i32 : i32
    %1 = arith.extui %0 : i1 to i32
    %c0_i32_0 = arith.constant 0 : i32
    %2 = arith.cmpi ne, %1, %c0_i32_0 : i32
    scf.if %2 {
      %cst = arith.constant 0.000000e+00 : f32
      %13 = vector.broadcast %cst : f32 to vector<8x256xf32>
      %c0_10 = arith.constant 0 : index
      %c0_11 = arith.constant 0 : index
      %14 = vector.load %arg5[%c0_10, %c0_11] : memref<8x256xf32, #tpu.memory_space<vmem>>, vector<8x256xf32>
      tpu.vector_store %arg5[%c0_10, %c0_11], %13 {strides = array<i32>} : memref<8x256xf32, #tpu.memory_space<vmem>>, vector<8x256xf32>,
    } else {
    }
    %c0 = arith.constant 0 : index
    %c0_1 = arith.constant 0 : index
    %3 = vector.load %arg2[%c0, %c0_1] : memref<8x256xf32, #tpu.memory_space<vmem>>, vector<8x256xf32>
    %c0_2 = arith.constant 0 : index
    %c0_3 = arith.constant 0 : index
    %4 = vector.load %arg3[%c0_2, %c0_3] : memref<8x256xf32, #tpu.memory_space<vmem>>, vector<8x256xf32>
    %5 = arith.subf %3, %4 : vector<8x256xf32>
    %6 = arith.mulf %5, %5 : vector<8x256xf32>
    %c0_4 = arith.constant 0 : index
    %c0_5 = arith.constant 0 : index
    %7 = vector.load %arg5[%c0_4, %c0_5] : memref<8x256xf32, #tpu.memory_space<vmem>>, vector<8x256xf32>
    %8 = arith.addf %7, %6 : vector<8x256xf32>
    %c0_6 = arith.constant 0 : index
    %c0_7 = arith.constant 0 : index
    %9 = vector.load %arg5[%c0_6, %c0_7] : memref<8x256xf32, #tpu.memory_space<vmem>>, vector<8x256xf32>
    tpu.vector_store %arg5[%c0_6, %c0_7], %8 {strides = array<i32>} : memref<8x256xf32, #tpu.memory_space<vmem>>, vector<8x256xf32>,
    %c0_i32_8 = arith.constant 0 : i32
    %10 = arith.cmpi eq, %arg1, %c0_i32_8 : i32
    %11 = arith.extui %10 : i1 to i32
    %c0_i32_9 = arith.constant 0 : i32
    %12 = arith.cmpi ne, %11, %c0_i32_9 : i32
    scf.if %12 {
      %c0_10 = arith.constant 0 : index
      %c0_11 = arith.constant 0 : index
      %13 = vector.load %arg5[%c0_10, %c0_11] : memref<8x256xf32, #tpu.memory_space<vmem>>, vector<8x256xf32>
      %14 = vector.shape_cast %13 : vector<8x256xf32> to vector<1x8x256xf32>
      %cst = arith.constant dense<0.000000e+00> : vector<1xf32>
      %15 = vector.multi_reduction <add>, %14, %cst [1, 2] : vector<1x8x256xf32> to vector<1xf32>
      %16 = vector.shape_cast %15 : vector<1xf32> to vector<1x1x1xf32>
      %17 = vector.extract %16[0, 0, 0] : f32 from vector<1x1x1xf32>
      %18 = vector.broadcast %17 : f32 to vector<1x8x128xf32>
      %c0_12 = arith.constant 0 : index
      %c0_13 = arith.constant 0 : index
      %c0_14 = arith.constant 0 : index
      %19 = vector.load %arg4[%c0_12, %c0_13, %c0_14] : memref<1x8x128xf32, #tpu.memory_space<vmem>>, vector<1x8x128xf32>
      tpu.vector_store %arg4[%c0_12, %c0_13, %c0_14], %18 {strides = array<i32>} : memref<1x8x128xf32, #tpu.memory_space<vmem>>, vector<1x8x128xf32>,
    } else {
    }
    return
  }
  func.func @transform_0(%arg0: i32, %arg1: i32) -> (i32, i32) {
    %c0_i32 = arith.constant 0 : i32
    return %arg0, %arg1 : i32, i32
  }
  func.func @transform_1(%arg0: i32, %arg1: i32) -> (i32, i32) {
    %c0_i32 = arith.constant 0 : i32
    return %arg0, %arg1 : i32, i32
  }
  func.func @transform_2(%arg0: i32, %arg1: i32) -> (i32, i32, i32) {
    %c0_i32 = arith.constant 0 : i32
    %c0_i32_0 = arith.constant 0 : i32
    %c0_i32_1 = arith.constant 0 : i32
    return %arg0, %c0_i32, %c0_i32_0 : i32, i32, i32
  }
}

</mosaic_0001>

<llo_original>
// kernel: tpu_custom_call.1
$region0: #{tpu_custom_call.1}
  #allocation0 [shape = 'u32[]', space=smem, size = 0x4, offset = 0x4, fixed_abs, tag = 'smem constant byte address 0x4 - core index']
  #allocation1 [shape = 'u32[72,128]{1,0:T(1,128)}', space=vmem, size = 0x9000, scoped, tag = 'internal scratch']
  #allocation2 [shape = 'f32[8,256]{1,0:T(8,128)}', space=vmem, size = 0x2000, scoped, tag = 'scratch operand']
  %s0 = inlined_call_operand.hbm [shape: f32[8,256], index: 0, kind: input, shape index: {}]
  %s1 = inlined_call_operand.hbm [shape: f32[8,256], index: 1, kind: input, shape index: {}]
  %s2 = inlined_call_operand.hbm [shape: f32[1,8,128], index: 2, kind: output, shape index: {}]
  %s3 = sld [smem:[#allocation0]]
  $region34: #{tpu_custom_call.1} parent=0
    _
  %s5 = ssub.s32 1, %s3
  %s6 = scalar_select 0, %s5, %s3
  $region1: #{tpu_custom_call.1} parent=0
    #allocation3 [shape = 'u8[8192]{0}', space=vmem, size = 0x2000, scoped, tag = 'input window, operand 0, single buffered']
    #allocation4 [shape = 's32[1]{0}', space=sflag, size = 0x4, scoped, tag = 'scoped memory for tpu_custom_call.1']
    #allocation5 [shape = 's32[1]{0}', space=sflag, size = 0x4, scoped, tag = 'scoped memory for tpu_custom_call.1']
    #allocation6 [shape = 'u8[8192]{0}', space=vmem, size = 0x2000, scoped, tag = 'input window, operand 1, single buffered']
    #allocation7 [shape = 's32[1]{0}', space=sflag, size = 0x4, scoped, tag = 'scoped memory for tpu_custom_call.1']
    #allocation8 [shape = 'u8[4096]{0}', space=vmem, size = 0x1000, scoped, tag = 'output window, operand 0, single buffered']
    %7 = vsyncpa [#allocation4], 0
    %8 = vsyncpa [#allocation7], 0
    %9 = vsyncpa [#allocation5], 0
    // Predicated region
    $region2: #{tpu_custom_call.1} parent=1 // pred_check
      _
    $region3: #{tpu_custom_call.1} parent=1 // pred_check_branch
      %11 = sbr.rel (0) target = $region5
    $region4: #{tpu_custom_call.1} parent=1 // pred_region
      %13 = vsyncadd [#allocation4], 0
      %s15 = sshll.u32 %s0, 4
      %s16 = int_to_ptr.hbm [resolvable:$true] %s15
      %s17 = sshll.u32 [#allocation3], 4
      %s18 = int_to_ptr.vmem [resolvable:$true] %s17
      %20 = dma.hbm_to_vmem [thread:$0]  %s16, 256, %s18, [#allocation4]
    $region5: #{tpu_custom_call.1} parent=1 // pred_fallthru
      _
    // Predicated region
    $region6: #{tpu_custom_call.1} parent=1 // pred_check
      _
    $region7: #{tpu_custom_call.1} parent=1 // pred_check_branch
      %22 = sbr.rel (0) target = $region9
    $region8: #{tpu_custom_call.1} parent=1 // pred_region
      %24 = vsyncadd [#allocation7], 0
      %s26 = sshll.u32 %s1, 4
      %s27 = int_to_ptr.hbm [resolvable:$true] %s26
      %s28 = sshll.u32 [#allocation6], 4
      %s29 = int_to_ptr.vmem [resolvable:$true] %s28
      %31 = dma.hbm_to_vmem [thread:$0]  %s27, 256, %s29, [#allocation7]
    $region9: #{tpu_custom_call.1} parent=1 // pred_fallthru
      _
    // Predicated region
    $region10: #{tpu_custom_call.1} parent=1 // pred_check
      _
    $region11: #{tpu_custom_call.1} parent=1 // pred_check_branch
      %33 = sbr.rel (0) target = $region13
    $region12: #{tpu_custom_call.1} parent=1 // pred_region
      %35 = dma.done [#allocation4], 256
    $region13: #{tpu_custom_call.1} parent=1 // pred_fallthru
      _
    // Predicated region
    $region14: #{tpu_custom_call.1} parent=1 // pred_check
      _
    $region15: #{tpu_custom_call.1} parent=1 // pred_check_branch
      %37 = sbr.rel (0) target = $region17
    $region16: #{tpu_custom_call.1} parent=1 // pred_region
      %39 = dma.done [#allocation7], 256
    $region17: #{tpu_custom_call.1} parent=1 // pred_fallthru
      _
    %p40 = scmp.eq.s32.totalorder 0, 0
    // Predicated region
    $region18: #{tpu_custom_call.1} parent=1 // pred_check
      %p41 = pneg %p40
    $region19: #{tpu_custom_call.1} parent=1 // pred_check_branch
      %43 = sbr.rel (%p41) target = $region21
    $region20: #{tpu_custom_call.1} parent=1 // pred_region
      %44 = vst [vmem:[#allocation2] sm:$0xff] 0.0
      %45 = vst [vmem:[#allocation2 + $0x8] sm:$0xff] 0.0
    $region21: #{tpu_custom_call.1} parent=1 // pred_fallthru
      _
    %v46 = vld [vmem:[#allocation3] sm:$0xff]
    %v47 = vld [vmem:[#allocation3 + $0x8] sm:$0xff]
    %v48 = vld [vmem:[#allocation6] sm:$0xff]
    %v49 = vld [vmem:[#allocation6 + $0x8] sm:$0xff]
    %v50 = vsub.f32 %v46, %v48
    %v51 = vsub.f32 %v47, %v49
    %v52 = vmul.f32 %v50, %v50
    %v53 = vmul.f32 %v51, %v51
    %v54 = vld [vmem:[#allocation2] sm:$0xff]
    %v55 = vld [vmem:[#allocation2 + $0x8] sm:$0xff]
    %v56 = vadd.f32 %v54, %v52
    %v57 = vadd.f32 %v55, %v53
    %58 = vst [vmem:[#allocation2] sm:$0xff] %v56
    %59 = vst [vmem:[#allocation2 + $0x8] sm:$0xff] %v57
    // Predicated region
    $region22: #{tpu_custom_call.1} parent=1 // pred_check
      %p60 = pneg %p40
    $region23: #{tpu_custom_call.1} parent=1 // pred_check_branch
      %62 = sbr.rel (%p60) target = $region25
    $region24: #{tpu_custom_call.1} parent=1 // pred_region
      %v63 = vld [vmem:[#allocation2] sm:$0xff]
      %v64 = vld [vmem:[#allocation2 + $0x8] sm:$0xff]
      %v65 = vadd.f32 %v63, %v64
      %66 = vadd.xlane.f32.xlu0 %v65
      %v67 = vpop.xlane.xlu0 %66
      %v68 = vrot.slane %v67, 4
      %v69 = vadd.f32 %v67, %v68
      %v70 = vrot.slane %v69, 2
      %v71 = vadd.f32 %v69, %v70
      %v72 = vrot.slane %v71, 1
      %v73 = vadd.f32 %v71, %v72
      %s74 = vtos %v73
      %v75 = vstv %s74
      %76 = vst [vmem:[#allocation8] sm:$0xff] %v75
    $region25: #{tpu_custom_call.1} parent=1 // pred_fallthru
      _
    // Predicated region
    $region26: #{tpu_custom_call.1} parent=1 // pred_check
      _
    $region27: #{tpu_custom_call.1} parent=1 // pred_check_branch
      %78 = sbr.rel (0) target = $region29
    $region28: #{tpu_custom_call.1} parent=1 // pred_region
      %80 = vsyncadd [#allocation5], 0
      %s82 = sshll.u32 [#allocation8], 4
      %s83 = int_to_ptr.vmem [resolvable:$true] %s82
      %s84 = sshll.u32 %s2, 4
      %s85 = int_to_ptr.hbm [resolvable:$true] %s84
      %87 = dma.vmem_to_hbm [thread:$0]  %s83, 128, %s85, [#allocation5]
    $region29: #{tpu_custom_call.1} parent=1 // pred_fallthru
      _
    // Predicated region
    $region30: #{tpu_custom_call.1} parent=1 // pred_check
      _
    $region31: #{tpu_custom_call.1} parent=1 // pred_check_branch
      %89 = sbr.rel (0) target = $region33
    $region32: #{tpu_custom_call.1} parent=1 // pred_region
      %91 = dma.done [#allocation5], 128
    $region33: #{tpu_custom_call.1} parent=1 // pred_fallthru
      _
    %92 = vsyncpa [#allocation4], 1
    %93 = vsyncpa [#allocation7], 1
    %94 = vsyncpa [#allocation5], 1

</llo_original>
